<compile_context>
chip_gen: v6e
topology: v6e:2x2x1
jax: 0.10.0
libtpu: 0.0.40
codegen_flags: <defaults>
</compile_context>

<pallas_src>
import jax
import jax.numpy as jnp
from jax.experimental import pallas as pl
from jax.experimental.pallas import tpu as pltpu


def _round_up(x, m):
    return ((x + m - 1) // m) * m


def _critic_kernel(x_ref, w1_ref, b1_ref, w2_ref, b2_ref, w3_ref, b3_ref,
                   out_ref):
    # fc1 + ReLU.  K = obs_dim is tiny (e.g. 8); f32 operands avoid any
    # per-call cast/pad of the states and cost next to nothing on the MXU.
    h = jnp.dot(x_ref[...], w1_ref[...], preferred_element_type=jnp.float32)
    h = jnp.maximum(h + b1_ref[...], 0.0)

    # fc2 + ReLU: bf16 operands, f32 MXU accumulation.  K = N = 256 matches the
    # full MXU width -> do not split.
    h = jnp.dot(h.astype(jnp.bfloat16), w2_ref[...],
                preferred_element_type=jnp.float32)
    h = jnp.maximum(h + b2_ref[...], 0.0)

    # fc3 (value head), computed directly as a lane-dense row:
    #   (1, H) @ (tile_b, H)^T -> (1, tile_b)
    # so the output writeback is tile_b * 4 bytes instead of a 128x lane-padded
    # column.  The transpose uses the XLU slot; stores stay dense.
    v_row = jnp.dot(w3_ref[...], h.astype(jnp.bfloat16).T,
                    preferred_element_type=jnp.float32)
    out_ref[...] = v_row + b3_ref[...]


def prepare_critic_params(w1, b1, w2, b2, w3, b3):
    """One-time weight preparation (hoisted out of the per-call path).

    Weights are input-major: y = x @ w + b.
    """
    H = w1.shape[1]
    return dict(
        w1=w1.astype(jnp.float32),                 # (obs_dim, H): tiny, keep f32
        b1=b1.reshape(1, H).astype(jnp.float32),
        w2=w2.astype(jnp.bfloat16),                # (H, H) bf16 MXU operand
        b2=b2.reshape(1, H).astype(jnp.float32),
        w3=w3.reshape(1, H).astype(jnp.bfloat16),  # value head as a (1, H) row
        b3=b3.reshape(1, 1).astype(jnp.float32),
    )


def critic_forward(states, params, *, tile_b=512):
    """states: (B, obs_dim) float -> (B, 1) float32 state values."""
    B, obs_dim = states.shape
    H = params["w1"].shape[1]

    # Tile selection:
    #  * small batches: ONE grid step, padded only to a multiple of 16 so the
    #    bf16 intermediate packs cleanly (no wasted second grid step);
    #  * large batches: lane-dense (multiple-of-128) tiles, default 512.
    b16 = _round_up(B, 16)
    if b16 <= tile_b:
        tile_b = b16
    else:
        tile_b = _round_up(tile_b, 128)
    b_pad = pl.cdiv(B, tile_b) * tile_b
    n_tiles = b_pad // tile_b

    x = states.astype(jnp.float32)
    if b_pad != B:
        x = jnp.zeros((b_pad, obs_dim), jnp.float32).at[:B].set(x)

    const = lambda shape: pl.BlockSpec(shape, lambda i: (0, 0))  # VMEM-resident

    out = pl.pallas_call(
        _critic_kernel,
        out_shape=jax.ShapeDtypeStruct((1, b_pad), jnp.float32),
        grid=(n_tiles,),
        in_specs=[
            pl.BlockSpec((tile_b, obs_dim), lambda i: (i, 0)),   # states tile
            const((obs_dim, H)),                                 # w1 (f32)
            const((1, H)),                                       # b1
            const((H, H)),                                       # w2 (bf16)
            const((1, H)),                                       # b2
            const((1, H)),                                       # w3 row (bf16)
            const((1, 1)),                                       # b3
        ],
        out_specs=pl.BlockSpec((1, tile_b), lambda i: (0, i)),   # lane-dense row
        compiler_params=pltpu.CompilerParams(
            dimension_semantics=("parallel",)),
    )(x, params["w1"], params["b1"], params["w2"], params["b2"],
      params["w3"], params["b3"])

    return out[0, :B].reshape(B, 1)


if __name__ == "__main__":
    # env.observation_space.shape = (8,)  ->  fc1: 8 -> 256, fc2: 256 -> 256,
    # fc3: 256 -> 1.  B = 200 exercises the single-tile small-batch path
    # (rows padded 200 -> 208 only inside the kernel call).
    obs_dim, hidden, batch = 8, 256, 200

    key = jax.random.PRNGKey(0)
    ks = jax.random.split(key, 7)
    lim1 = 1.0 / obs_dim ** 0.5
    lim2 = 1.0 / hidden ** 0.5

    w1 = jax.random.uniform(ks[0], (obs_dim, hidden), jnp.float32, -lim1, lim1)
    b1 = jax.random.uniform(ks[1], (hidden,), jnp.float32, -lim1, lim1)
    w2 = jax.random.uniform(ks[2], (hidden, hidden), jnp.float32, -lim2, lim2)
    b2 = jax.random.uniform(ks[3], (hidden,), jnp.float32, -lim2, lim2)
    w3 = jax.random.uniform(ks[4], (hidden, 1), jnp.float32, -lim2, lim2)
    b3 = jax.random.uniform(ks[5], (1,), jnp.float32, -lim2, lim2)
    states = jax.random.normal(ks[6], (batch, obs_dim), jnp.float32)

    params = prepare_critic_params(w1, b1, w2, b2, w3, b3)   # one-time prep
    values = jax.block_until_ready(critic_forward(states, params))

    # Reference with matching mixed precision (fc1 f32, fc2/fc3 bf16 operands
    # with f32 accumulation).
    bf16, f32 = jnp.bfloat16, jnp.float32
    h1 = jnp.maximum(states @ w1 + b1, 0.0)
    h2 = jnp.maximum(jnp.dot(h1.astype(bf16), w2.astype(bf16),
                             preferred_element_type=f32) + b2, 0.0)
    values_ref = jnp.dot(h2.astype(bf16), w3.astype(bf16),
                         preferred_element_type=f32) + b3

    assert values.shape == (batch, 1)
    assert jnp.allclose(values, values_ref, atol=1e-2, rtol=1e-2)

    # Sanity vs. the exact f32 forward of the module (loose tol: bf16 weights).
    h1f = jnp.maximum(states @ w1 + b1, 0.0)
    h2f = jnp.maximum(h1f @ w2 + b2, 0.0)
    values_f32 = h2f @ w3 + b3
    assert jnp.allclose(values, values_f32, atol=5e-2, rtol=5e-2)

    print("KERNEL_OK")
</pallas_src>

<mosaic_0001>
module attributes {stable_mosaic.version = 11 : i64} {
  func.func @_critic_kernel(%arg0: i32, %arg1: memref<208x8xf32, #tpu.memory_space<vmem>>, %arg2: memref<8x256xf32, #tpu.memory_space<vmem>>, %arg3: memref<1x256xf32, #tpu.memory_space<vmem>>, %arg4: memref<256x256xbf16, #tpu.memory_space<vmem>>, %arg5: memref<1x256xf32, #tpu.memory_space<vmem>>, %arg6: memref<1x256xbf16, #tpu.memory_space<vmem>>, %arg7: memref<1x1xf32, #tpu.memory_space<vmem>>, %arg8: memref<1x208xf32, #tpu.memory_space<vmem>>) attributes {dimension_semantics = [#tpu.dimension_semantics<parallel>], iteration_bounds = array<i64: 1>, scalar_prefetch = 0 : i64, scratch_operands = 0 : i64, tpu.core_type = #tpu.core_type<tc>, window_params = [{transform_indices = @transform_0, window_bounds = array<i64: 208, 8>}, {pipeline_mode = #tpu.pipeline_mode<synchronous>, transform_indices = @transform_1, window_bounds = array<i64: 8, 256>}, {pipeline_mode = #tpu.pipeline_mode<synchronous>, transform_indices = @transform_2, window_bounds = array<i64: 1, 256>}, {pipeline_mode = #tpu.pipeline_mode<synchronous>, transform_indices = @transform_3, window_bounds = array<i64: 256, 256>}, {pipeline_mode = #tpu.pipeline_mode<synchronous>, transform_indices = @transform_4, window_bounds = array<i64: 1, 256>}, {pipeline_mode = #tpu.pipeline_mode<synchronous>, transform_indices = @transform_5, window_bounds = array<i64: 1, 256>}, {pipeline_mode = #tpu.pipeline_mode<synchronous>, transform_indices = @transform_6, window_bounds = array<i64: 1, 1>}, {transform_indices = @transform_7, window_bounds = array<i64: 1, 208>}]} {
    %c0 = arith.constant 0 : index
    %c0_0 = arith.constant 0 : index
    %0 = vector.load %arg1[%c0, %c0_0] : memref<208x8xf32, #tpu.memory_space<vmem>>, vector<208x8xf32>
    %c0_1 = arith.constant 0 : index
    %c0_2 = arith.constant 0 : index
    %1 = vector.load %arg2[%c0_1, %c0_2] : memref<8x256xf32, #tpu.memory_space<vmem>>, vector<8x256xf32>
    %cst = arith.constant dense<0.000000e+00> : vector<208x256xf32>
    %2 = tpu.matmul %0, %1, %cst {dimension_numbers = #tpu.dot_dimension_numbers<[1], [0], [0], [1], [0, 0, 1, 1], [], []>} : vector<208x8xf32>, vector<8x256xf32>, vector<208x256xf32> -> vector<208x256xf32>
    %c0_3 = arith.constant 0 : index
    %c0_4 = arith.constant 0 : index
    %3 = vector.load %arg3[%c0_3, %c0_4] : memref<1x256xf32, #tpu.memory_space<vmem>>, vector<1x256xf32>
    %4 = vector.broadcast %3 : vector<1x256xf32> to vector<208x256xf32>
    %5 = arith.addf %2, %4 : vector<208x256xf32>
    %cst_5 = arith.constant 0.000000e+00 : f32
    %6 = vector.broadcast %cst_5 : f32 to vector<208x256xf32>
    %7 = arith.maximumf %5, %6 : vector<208x256xf32>
    %8 = arith.truncf %7 : vector<208x256xf32> to vector<208x256xbf16>
    %c0_6 = arith.constant 0 : index
    %c0_7 = arith.constant 0 : index
    %9 = vector.load %arg4[%c0_6, %c0_7] : memref<256x256xbf16, #tpu.memory_space<vmem>>, vector<256x256xbf16>
    %cst_8 = arith.constant dense<0.000000e+00> : vector<208x256xf32>
    %10 = tpu.matmul %8, %9, %cst_8 {dimension_numbers = #tpu.dot_dimension_numbers<[1], [0], [0], [1], [0, 0, 1, 1], [], []>} : vector<208x256xbf16>, vector<256x256xbf16>, vector<208x256xf32> -> vector<208x256xf32>
    %c0_9 = arith.constant 0 : index
    %c0_10 = arith.constant 0 : index
    %11 = vector.load %arg5[%c0_9, %c0_10] : memref<1x256xf32, #tpu.memory_space<vmem>>, vector<1x256xf32>
    %12 = vector.broadcast %11 : vector<1x256xf32> to vector<208x256xf32>
    %13 = arith.addf %10, %12 : vector<208x256xf32>
    %cst_11 = arith.constant 0.000000e+00 : f32
    %14 = vector.broadcast %cst_11 : f32 to vector<208x256xf32>
    %15 = arith.maximumf %13, %14 : vector<208x256xf32>
    %c0_12 = arith.constant 0 : index
    %c0_13 = arith.constant 0 : index
    %16 = vector.load %arg6[%c0_12, %c0_13] : memref<1x256xbf16, #tpu.memory_space<vmem>>, vector<1x256xbf16>
    %17 = arith.truncf %15 : vector<208x256xf32> to vector<208x256xbf16>
    %18 = tpu.transpose %17, [1, 0] : vector<208x256xbf16> -> vector<256x208xbf16>
    %cst_14 = arith.constant dense<0.000000e+00> : vector<1x208xf32>
    %19 = tpu.matmul %16, %18, %cst_14 {dimension_numbers = #tpu.dot_dimension_numbers<[1], [0], [0], [1], [0, 0, 1, 1], [], []>} : vector<1x256xbf16>, vector<256x208xbf16>, vector<1x208xf32> -> vector<1x208xf32>
    %c0_15 = arith.constant 0 : index
    %c0_16 = arith.constant 0 : index
    %20 = vector.load %arg7[%c0_15, %c0_16] : memref<1x1xf32, #tpu.memory_space<vmem>>, vector<1x1xf32>
    %21 = vector.broadcast %20 : vector<1x1xf32> to vector<1x208xf32>
    %22 = arith.addf %19, %21 : vector<1x208xf32>
    %c0_17 = arith.constant 0 : index
    %c0_18 = arith.constant 0 : index
    %23 = vector.load %arg8[%c0_17, %c0_18] : memref<1x208xf32, #tpu.memory_space<vmem>>, vector<1x208xf32>
    tpu.vector_store %arg8[%c0_17, %c0_18], %22 {strides = array<i32>} : memref<1x208xf32, #tpu.memory_space<vmem>>, vector<1x208xf32>,
    return
  }
  func.func @transform_0(%arg0: i32) -> (i32, i32) {
    %c0_i32 = arith.constant 0 : i32
    %c0_i32_0 = arith.constant 0 : i32
    return %arg0, %c0_i32 : i32, i32
  }
  func.func @transform_1(%arg0: i32) -> (i32, i32) {
    %c0_i32 = arith.constant 0 : i32
    %c0_i32_0 = arith.constant 0 : i32
    %c0_i32_1 = arith.constant 0 : i32
    return %c0_i32, %c0_i32_0 : i32, i32
  }
  func.func @transform_2(%arg0: i32) -> (i32, i32) {
    %c0_i32 = arith.constant 0 : i32
    %c0_i32_0 = arith.constant 0 : i32
    %c0_i32_1 = arith.constant 0 : i32
    return %c0_i32, %c0_i32_0 : i32, i32
  }
  func.func @transform_3(%arg0: i32) -> (i32, i32) {
    %c0_i32 = arith.constant 0 : i32
    %c0_i32_0 = arith.constant 0 : i32
    %c0_i32_1 = arith.constant 0 : i32
    return %c0_i32, %c0_i32_0 : i32, i32
  }
  func.func @transform_4(%arg0: i32) -> (i32, i32) {
    %c0_i32 = arith.constant 0 : i32
    %c0_i32_0 = arith.constant 0 : i32
    %c0_i32_1 = arith.constant 0 : i32
    return %c0_i32, %c0_i32_0 : i32, i32
  }
  func.func @transform_5(%arg0: i32) -> (i32, i32) {
    %c0_i32 = arith.constant 0 : i32
    %c0_i32_0 = arith.constant 0 : i32
    %c0_i32_1 = arith.constant 0 : i32
    return %c0_i32, %c0_i32_0 : i32, i32
  }
  func.func @transform_6(%arg0: i32) -> (i32, i32) {
    %c0_i32 = arith.constant 0 : i32
    %c0_i32_0 = arith.constant 0 : i32
    %c0_i32_1 = arith.constant 0 : i32
    return %c0_i32, %c0_i32_0 : i32, i32
  }
  func.func @transform_7(%arg0: i32) -> (i32, i32) {
    %c0_i32 = arith.constant 0 : i32
    %c0_i32_0 = arith.constant 0 : i32
    return %c0_i32, %arg0 : i32, i32
  }
}

</mosaic_0001>

<llo_original>
// kernel: tpu_custom_call.1
$region0: #{tpu_custom_call.1}
  #allocation0 [shape = 'u32[]', space=smem, size = 0x4, offset = 0x4, fixed_abs, tag = 'smem constant byte address 0x4 - core index']
  #allocation1 [shape = 'u32[144,128]{1,0:T(1,128)}', space=vmem, size = 0x12000, scoped, tag = 'internal scratch']
  #allocation2 [shape = 'f32[1,1]{1,0:T(1,128)S(1)}', space=vmem, size = 0x200, scoped, tag = 'scoped memory for tpu_custom_call.1']
  %s0 = inlined_call_operand.vmem [shape: f32[208,8], index: 0, kind: input, shape index: {}]
  %s1 = inlined_call_operand.vmem [shape: f32[8,256], index: 1, kind: input, shape index: {}]
  %s2 = inlined_call_operand.vmem [shape: f32[1,256], index: 2, kind: input, shape index: {}]
  %s3 = inlined_call_operand.hbm [shape: bf16[256,256], index: 3, kind: input, shape index: {}]
  %s4 = inlined_call_operand.vmem [shape: f32[1,256], index: 4, kind: input, shape index: {}]
  %s5 = inlined_call_operand.vmem [shape: bf16[1,256], index: 5, kind: input, shape index: {}]
  %s6 = inlined_call_operand.<no memory space> [shape: f32[1,1], index: 6, kind: input, shape index: {}]
  %s7 = inlined_call_operand.hbm [shape: f32[1,208], index: 7, kind: output, shape index: {}]
  %s8 = sld [smem:[#allocation0]]
  $region42: #{tpu_custom_call.1} parent=0
    _
  %s10 = ssub.s32 1, %s8
  %s11 = scalar_select 0, %s10, %s8
  %v12 = vstv %s6
  %13 = vst [vmem:[#allocation2] sm:$0x1] %v12
  $region1: #{tpu_custom_call.1} parent=0
    #allocation3 [shape = 'u8[131072]{0}', space=vmem, size = 0x20000, scoped, tag = 'input window, operand 3, single buffered']
    #allocation4 [shape = 's32[1]{0}', space=sflag, size = 0x4, scoped, tag = 'scoped memory for tpu_custom_call.1']
    #allocation5 [shape = 's32[1]{0}', space=sflag, size = 0x4, scoped, tag = 'scoped memory for tpu_custom_call.1']
    #allocation6 [shape = 'u8[1024]{0}', space=vmem, size = 0x400, scoped, tag = 'output window, operand 0, single buffered']
    %14 = vsyncpa [#allocation4], 0
    %15 = vsyncpa [#allocation5], 0
    // Predicated region
    $region2: #{tpu_custom_call.1} parent=1 // pred_check
      _
    $region3: #{tpu_custom_call.1} parent=1 // pred_check_branch
      %17 = sbr.rel (0) target = $region5
    $region4: #{tpu_custom_call.1} parent=1 // pred_region
      _
    $region5: #{tpu_custom_call.1} parent=1 // pred_fallthru
      _
    // Predicated region
    $region6: #{tpu_custom_call.1} parent=1 // pred_check
      _
    $region7: #{tpu_custom_call.1} parent=1 // pred_check_branch
      %19 = sbr.rel (0) target = $region9
    $region8: #{tpu_custom_call.1} parent=1 // pred_region
      _
    $region9: #{tpu_custom_call.1} parent=1 // pred_fallthru
      _
    // Predicated region
    $region10: #{tpu_custom_call.1} parent=1 // pred_check
      _
    $region11: #{tpu_custom_call.1} parent=1 // pred_check_branch
      %21 = sbr.rel (0) target = $region13
    $region12: #{tpu_custom_call.1} parent=1 // pred_region
      _
    $region13: #{tpu_custom_call.1} parent=1 // pred_fallthru
      _
    // Predicated region
    $region14: #{tpu_custom_call.1} parent=1 // pred_check
      _
    $region15: #{tpu_custom_call.1} parent=1 // pred_check_branch
      %23 = sbr.rel (0) target = $region17
    $region16: #{tpu_custom_call.1} parent=1 // pred_region
      %s25 = ssub.s32 4096, 4096
      %26 = vsyncadd [#allocation4], %s25
      %s27 = sshll.u32 [#allocation3], 4
      %s28 = int_to_ptr.vmem [resolvable:$true] %s27
      %33 = dma.hbm_to_vmem [thread:$0]  %s3, 4096, %s28, [#allocation4], 128, 128, 8
    $region17: #{tpu_custom_call.1} parent=1 // pred_fallthru
      _
    // Predicated region
    $region18: #{tpu_custom_call.1} parent=1 // pred_check
      _
    $region19: #{tpu_custom_call.1} parent=1 // pred_check_branch
      %35 = sbr.rel (0) target = $region21
    $region20: #{tpu_custom_call.1} parent=1 // pred_region
      _
    $region21: #{tpu_custom_call.1} parent=1 // pred_fallthru
      _
    // Predicated region
    $region22: #{tpu_custom_call.1} parent=1 // pred_check
      _
    $region23: #{tpu_custom_call.1} parent=1 // pred_check_branch
      %37 = sbr.rel (0) target = $region25
    $region24: #{tpu_custom_call.1} parent=1 // pred_region
      _
    $region25: #{tpu_custom_call.1} parent=1 // pred_fallthru
      _
    // Predicated region
    $region26: #{tpu_custom_call.1} parent=1 // pred_check
      _
    $region27: #{tpu_custom_call.1} parent=1 // pred_check_branch
      %39 = sbr.rel (0) target = $region29
    $region28: #{tpu_custom_call.1} parent=1 // pred_region
      _
    $region29: #{tpu_custom_call.1} parent=1 // pred_fallthru
      _
    // Predicated region
    $region30: #{tpu_custom_call.1} parent=1 // pred_check
      _
    $region31: #{tpu_custom_call.1} parent=1 // pred_check_branch
      %41 = sbr.rel (0) target = $region33
    $region32: #{tpu_custom_call.1} parent=1 // pred_region
      %42 = dma.done [#allocation4], 4096
    $region33: #{tpu_custom_call.1} parent=1 // pred_fallthru
      _
    %v44 = vld [vmem:[%s0] sm:$0xff]
    %v45 = vld [vmem:[%s0 + $0x8] sm:$0xff]
    %v46 = vld [vmem:[%s0 + $0x10] sm:$0xff]
    %v47 = vld [vmem:[%s0 + $0x18] sm:$0xff]
    %v48 = vld [vmem:[%s0 + $0x20] sm:$0xff]
    %v49 = vld [vmem:[%s0 + $0x28] sm:$0xff]
    %v50 = vld [vmem:[%s0 + $0x30] sm:$0xff]
    %v51 = vld [vmem:[%s0 + $0x38] sm:$0xff]
    %v52 = vld [vmem:[%s0 + $0x40] sm:$0xff]
    %v53 = vld [vmem:[%s0 + $0x48] sm:$0xff]
    %v54 = vld [vmem:[%s0 + $0x50] sm:$0xff]
    %v55 = vld [vmem:[%s0 + $0x58] sm:$0xff]
    %v56 = vld [vmem:[%s0 + $0x60] sm:$0xff]
    %v57 = vld [vmem:[%s0 + $0x68] sm:$0xff]
    %v58 = vld [vmem:[%s0 + $0x70] sm:$0xff]
    %v59 = vld [vmem:[%s0 + $0x78] sm:$0xff]
    %v60 = vld [vmem:[%s0 + $0x80] sm:$0xff]
    %v61 = vld [vmem:[%s0 + $0x88] sm:$0xff]
    %v62 = vld [vmem:[%s0 + $0x90] sm:$0xff]
    %v63 = vld [vmem:[%s0 + $0x98] sm:$0xff]
    %v64 = vld [vmem:[%s0 + $0xa0] sm:$0xff]
    %v65 = vld [vmem:[%s0 + $0xa8] sm:$0xff]
    %v66 = vld [vmem:[%s0 + $0xb0] sm:$0xff]
    %v67 = vld [vmem:[%s0 + $0xb8] sm:$0xff]
    %v68 = vld [vmem:[%s0 + $0xc0] sm:$0xff]
    %v69 = vld [vmem:[%s0 + $0xc8] sm:$0xff]
    %v70 = vld [vmem:[%s1] sm:$0xff]
    %v71 = vld [vmem:[%s1 + $0x8] sm:$0xff]
    %v72 = vld [vmem:[%s2] sm:$0x3]
    %v74 = vlaneseq
    %v75 = vshrl.u32 %v74, 7
    %v76 = vsub.s32 0, %v75
    %v77 = vrot.slane %v72, %v76
    %v78 = vlaneseq
    %v79 = vshrl.u32 %v78, 7
    %v80 = vsub.s32 1, %v79
    %v81 = vrot.slane %v72, %v80
    %vm84 = vcmask 64512
    %v86 = vsel %vm84, %v44, 0
    %v89 = vsel %vm84, %v45, 0
    %v92 = vsel %vm84, %v46, 0
    %v95 = vsel %vm84, %v47, 0
    %v98 = vsel %vm84, %v48, 0
    %v101 = vsel %vm84, %v49, 0
    %v104 = vsel %vm84, %v50, 0
    %v107 = vsel %vm84, %v51, 0
    %v110 = vsel %vm84, %v52, 0
    %v113 = vsel %vm84, %v53, 0
    %v116 = vsel %vm84, %v54, 0
    %v119 = vsel %vm84, %v55, 0
    %v122 = vsel %vm84, %v56, 0
    %v125 = vsel %vm84, %v57, 0
    %v128 = vsel %vm84, %v58, 0
    %v131 = vsel %vm84, %v59, 0
    %v134 = vsel %vm84, %v60, 0
    %v137 = vsel %vm84, %v61, 0
    %v140 = vsel %vm84, %v62, 0
    %v143 = vsel %vm84, %v63, 0
    %v146 = vsel %vm84, %v64, 0
    %v149 = vsel %vm84, %v65, 0
    %v152 = vsel %vm84, %v66, 0
    %v155 = vsel %vm84, %v67, 0
    %v158 = vsel %vm84, %v68, 0
    %v161 = vsel %vm84, %v69, 0
    %163 = vmatprep.subr.mxu0 0.0
    %164 = vmatpush1.msra.mxu0 0.0
    %165 = vmatprep.subr.mxu0 0.0
    %166 = vmatpush1.msra.mxu0 0.0
    %167 = vmatprep.subr.mxu0 0.0
    %168 = vmatpush1.msra.mxu0 0.0
    %169 = vmatprep.subr.mxu0 0.0
    %170 = vmatpush1.msra.mxu0 0.0
    %171 = vmatprep.subr.mxu0 0.0
    %172 = vmatpush1.msra.mxu0 0.0
    %173 = vmatprep.subr.mxu0 0.0
    %174 = vmatpush1.msra.mxu0 0.0
    %175 = vmatprep.subr.mxu0 0.0
    %176 = vmatpush1.msra.mxu0 0.0
    %177 = vmatprep.subr.mxu0 0.0
    %178 = vmatpush1.msra.mxu0 0.0
    %179 = vmatprep.subr.mxu0 0.0
    %180 = vmatpush1.msra.mxu0 0.0
    %181 = vmatprep.subr.mxu0 0.0
    %182 = vmatpush1.msra.mxu0 0.0
    %183 = vmatprep.subr.mxu0 0.0
    %184 = vmatpush1.msra.mxu0 0.0
    %185 = vmatprep.subr.mxu0 0.0
    %186 = vmatpush1.msra.mxu0 0.0
    %187 = vmatprep.subr.mxu0 0.0
    %188 = vmatpush1.msra.mxu0 0.0
    %189 = vmatprep.subr.mxu0 0.0
    %190 = vmatpush1.msra.mxu0 0.0
    %191 = vmatprep.subr.mxu0 0.0
    %192 = vmatpush1.msra.mxu0 0.0
    %193 = vmatprep.subr.mxu0 %v71
    %194 = vmatpush1.msra.mxu0 %v70
    %195 = vmatprep.subr.mxu0 0.0
    %196 = vmatpush2.msra.mxu0 0.0
    %197 = vmatprep.subr.mxu0 0.0
    %198 = vmatpush2.msra.mxu0 0.0
    %199 = vmatprep.subr.mxu0 0.0
    %200 = vmatpush2.msra.mxu0 0.0
    %201 = vmatprep.subr.mxu0 0.0
    %202 = vmatpush2.msra.mxu0 0.0
    %203 = vmatprep.subr.mxu0 0.0
    %204 = vmatpush2.msra.mxu0 0.0
    %205 = vmatprep.subr.mxu0 0.0
    %206 = vmatpush2.msra.mxu0 0.0
    %207 = vmatprep.subr.mxu0 0.0
    %208 = vmatpush2.msra.mxu0 0.0
    %209 = vmatprep.subr.mxu0 0.0
    %210 = vmatpush2.msra.mxu0 0.0
    %211 = vmatprep.subr.mxu0 0.0
    %212 = vmatpush2.msra.mxu0 0.0
    %213 = vmatprep.subr.mxu0 0.0
    %214 = vmatpush2.msra.mxu0 0.0
    %215 = vmatprep.subr.mxu0 0.0
    %216 = vmatpush2.msra.mxu0 0.0
    %217 = vmatprep.subr.mxu0 0.0
    %218 = vmatpush2.msra.mxu0 0.0
    %219 = vmatprep.subr.mxu0 0.0
    %220 = vmatpush2.msra.mxu0 0.0
    %221 = vmatprep.subr.mxu0 0.0
    %222 = vmatpush2.msra.mxu0 0.0
    %223 = vmatprep.subr.mxu0 0.0
    %224 = vmatpush2.msra.mxu0 0.0
    %225 = vmatprep.subr.mxu0 0.0
    %226 = vmatpush2.msra.mxu0 0.0
    %227 = vmatprep.mubr.f32.mxu0 0.0
    %228 = vmatmul.mubr.f32.gmra.mxu0 %v86
    %v229 = vpop.f32.mrf.mxu0
    %v230 = vadd.f32 %v77, %v229
    %v231 = vpop.f32.mrf.mxu0
    %v232 = vadd.f32 %v81, %v231
    %233 = vmatprep.mubr.f32.mxu0 0.0
    %234 = vmatmul.mubr.f32.gmra.mxu0 %v89
    %v235 = vpop.f32.mrf.mxu0
    %v236 = vadd.f32 %v77, %v235
    %v237 = vpop.f32.mrf.mxu0
    %v238 = vadd.f32 %v81, %v237
    %239 = vmatprep.mubr.f32.mxu0 0.0
    %240 = vmatmul.mubr.f32.gmra.mxu0 %v92
    %v241 = vpop.f32.mrf.mxu0
    %v242 = vadd.f32 %v77, %v241
    %v243 = vpop.f32.mrf.mxu0
    %v244 = vadd.f32 %v81, %v243
    %245 = vmatprep.mubr.f32.mxu0 0.0
    %246 = vmatmul.mubr.f32.gmra.mxu0 %v95
    %v247 = vpop.f32.mrf.mxu0
    %v248 = vadd.f32 %v77, %v247
    %v249 = vpop.f32.mrf.mxu0
    %v250 = vadd.f32 %v81, %v249
    %251 = vmatprep.mubr.f32.mxu0 0.0
    %252 = vmatmul.mubr.f32.gmra.mxu0 %v98
    %v253 = vpop.f32.mrf.mxu0
    %v254 = vadd.f32 %v77, %v253
    %v255 = vpop.f32.mrf.mxu0
    %v256 = vadd.f32 %v81, %v255
    %257 = vmatprep.mubr.f32.mxu0 0.0
    %258 = vmatmul.mubr.f32.gmra.mxu0 %v101
    %v259 = vpop.f32.mrf.mxu0
    %v260 = vadd.f32 %v77, %v259
    %v261 = vpop.f32.mrf.mxu0
    %v262 = vadd.f32 %v81, %v261
    %263 = vmatprep.mubr.f32.mxu0 0.0
    %264 = vmatmul.mubr.f32.gmra.mxu0 %v104
    %v265 = vpop.f32.mrf.mxu0
    %v266 = vadd.f32 %v77, %v265
    %v267 = vpop.f32.mrf.mxu0
    %v268 = vadd.f32 %v81, %v267
    %269 = vmatprep.mubr.f32.mxu0 0.0
    %270 = vmatmul.mubr.f32.gmra.mxu0 %v107
    %v271 = vpop.f32.mrf.mxu0
    %v272 = vadd.f32 %v77, %v271
    %v273 = vpop.f32.mrf.mxu0
    %v274 = vadd.f32 %v81, %v273
    %275 = vmatprep.mubr.f32.mxu0 0.0
    %276 = vmatmul.mubr.f32.gmra.mxu0 %v110
    %v277 = vpop.f32.mrf.mxu0
    %v278 = vadd.f32 %v77, %v277
    %v279 = vpop.f32.mrf.mxu0
    %v280 = vadd.f32 %v81, %v279
    %281 = vmatprep.mubr.f32.mxu0 0.0
    %282 = vmatmul.mubr.f32.gmra.mxu0 %v113
    %v283 = vpop.f32.mrf.mxu0
    %v284 = vadd.f32 %v77, %v283
    %v285 = vpop.f32.mrf.mxu0
    %v286 = vadd.f32 %v81, %v285
    %287 = vmatprep.mubr.f32.mxu0 0.0
    %288 = vmatmul.mubr.f32.gmra.mxu0 %v116
    %v289 = vpop.f32.mrf.mxu0
    %v290 = vadd.f32 %v77, %v289
    %v291 = vpop.f32.mrf.mxu0
    %v292 = vadd.f32 %v81, %v291
    %293 = vmatprep.mubr.f32.mxu0 0.0
    %294 = vmatmul.mubr.f32.gmra.mxu0 %v119
    %v295 = vpop.f32.mrf.mxu0
    %v296 = vadd.f32 %v77, %v295
    %v297 = vpop.f32.mrf.mxu0
    %v298 = vadd.f32 %v81, %v297
    %299 = vmatprep.mubr.f32.mxu0 0.0
    %300 = vmatmul.mubr.f32.gmra.mxu0 %v122
    %v301 = vpop.f32.mrf.mxu0
    %v302 = vadd.f32 %v77, %v301
    %v303 = vpop.f32.mrf.mxu0
    %v304 = vadd.f32 %v81, %v303
    %305 = vmatprep.mubr.f32.mxu0 0.0
    %306 = vmatmul.mubr.f32.gmra.mxu0 %v125
    %v307 = vpop.f32.mrf.mxu0
    %v308 = vadd.f32 %v77, %v307
    %v309 = vpop.f32.mrf.mxu0
    %v310 = vadd.f32 %v81, %v309
    %311 = vmatprep.mubr.f32.mxu0 0.0
    %312 = vmatmul.mubr.f32.gmra.mxu0 %v128
    %v313 = vpop.f32.mrf.mxu0
    %v314 = vadd.f32 %v77, %v313
    %v315 = vpop.f32.mrf.mxu0
    %v316 = vadd.f32 %v81, %v315
    %317 = vmatprep.mubr.f32.mxu0 0.0
    %318 = vmatmul.mubr.f32.gmra.mxu0 %v131
    %v319 = vpop.f32.mrf.mxu0
    %v320 = vadd.f32 %v77, %v319
    %v321 = vpop.f32.mrf.mxu0
    %v322 = vadd.f32 %v81, %v321
    %323 = vmatprep.mubr.f32.mxu0 0.0
    %324 = vmatmul.mubr.f32.gmra.mxu0 %v134
    %v325 = vpop.f32.mrf.mxu0
    %v326 = vadd.f32 %v77, %v325
    %v327 = vpop.f32.mrf.mxu0
    %v328 = vadd.f32 %v81, %v327
    %329 = vmatprep.mubr.f32.mxu0 0.0
    %330 = vmatmul.mubr.f32.gmra.mxu0 %v137
    %v331 = vpop.f32.mrf.mxu0
    %v332 = vadd.f32 %v77, %v331
    %v333 = vpop.f32.mrf.mxu0
    %v334 = vadd.f32 %v81, %v333
    %335 = vmatprep.mubr.f32.mxu0 0.0
    %336 = vmatmul.mubr.f32.gmra.mxu0 %v140
    %v337 = vpop.f32.mrf.mxu0
    %v338 = vadd.f32 %v77, %v337
    %v339 = vpop.f32.mrf.mxu0
    %v340 = vadd.f32 %v81, %v339
    %341 = vmatprep.mubr.f32.mxu0 0.0
    %342 = vmatmul.mubr.f32.gmra.mxu0 %v143
    %v343 = vpop.f32.mrf.mxu0
    %v344 = vadd.f32 %v77, %v343
    %v345 = vpop.f32.mrf.mxu0
    %v346 = vadd.f32 %v81, %v345
    %347 = vmatprep.mubr.f32.mxu0 0.0
    %348 = vmatmul.mubr.f32.gmra.mxu0 %v146
    %v349 = vpop.f32.mrf.mxu0
    %v350 = vadd.f32 %v77, %v349
    %v351 = vpop.f32.mrf.mxu0
    %v352 = vadd.f32 %v81, %v351
    %353 = vmatprep.mubr.f32.mxu0 0.0
    %354 = vmatmul.mubr.f32.gmra.mxu0 %v149
    %v355 = vpop.f32.mrf.mxu0
    %v356 = vadd.f32 %v77, %v355
    %v357 = vpop.f32.mrf.mxu0
    %v358 = vadd.f32 %v81, %v357
    %359 = vmatprep.mubr.f32.mxu0 0.0
    %360 = vmatmul.mubr.f32.gmra.mxu0 %v152
    %v361 = vpop.f32.mrf.mxu0
    %v362 = vadd.f32 %v77, %v361
    %v363 = vpop.f32.mrf.mxu0
    %v364 = vadd.f32 %v81, %v363
    %365 = vmatprep.mubr.f32.mxu0 0.0
    %366 = vmatmul.mubr.f32.gmra.mxu0 %v155
    %v367 = vpop.f32.mrf.mxu0
    %v368 = vadd.f32 %v77, %v367
    %v369 = vpop.f32.mrf.mxu0
    %v370 = vadd.f32 %v81, %v369
    %371 = vmatprep.mubr.f32.mxu0 0.0
    %372 = vmatmul.mubr.f32.gmra.mxu0 %v158
    %v373 = vpop.f32.mrf.mxu0
    %v374 = vadd.f32 %v77, %v373
    %v375 = vpop.f32.mrf.mxu0
    %v376 = vadd.f32 %v81, %v375
    %377 = vmatprep.mubr.f32.mxu0 0.0
    %378 = vmatmul.mubr.f32.gmra.mxu0 %v161
    %v379 = vpop.f32.mrf.mxu0
    %v380 = vadd.f32 %v77, %v379
    %v381 = vpop.f32.mrf.mxu0
    %v382 = vadd.f32 %v81, %v381
    %383 = vdwg.mxu0
    %v384 = vmax.f32 %v230, 0.0
    %v385 = vmax.f32 %v232, 0.0
    %v386 = vmax.f32 %v236, 0.0
    %v387 = vmax.f32 %v238, 0.0
    %v388 = vmax.f32 %v242, 0.0
    %v389 = vmax.f32 %v244, 0.0
    %v390 = vmax.f32 %v248, 0.0
    %v391 = vmax.f32 %v250, 0.0
    %v392 = vmax.f32 %v254, 0.0
    %v393 = vmax.f32 %v256, 0.0
    %v394 = vmax.f32 %v260, 0.0
    %v395 = vmax.f32 %v262, 0.0
    %v396 = vmax.f32 %v266, 0.0
    %v397 = vmax.f32 %v268, 0.0
    %v398 = vmax.f32 %v272, 0.0
    %v399 = vmax.f32 %v274, 0.0
    %v400 = vmax.f32 %v278, 0.0
    %v401 = vmax.f32 %v280, 0.0
    %v402 = vmax.f32 %v284, 0.0
    %v403 = vmax.f32 %v286, 0.0
    %v404 = vmax.f32 %v290, 0.0
    %v405 = vmax.f32 %v292, 0.0
    %v406 = vmax.f32 %v296, 0.0
    %v407 = vmax.f32 %v298, 0.0
    %v408 = vmax.f32 %v302, 0.0
    %v409 = vmax.f32 %v304, 0.0
    %v410 = vmax.f32 %v308, 0.0
    %v411 = vmax.f32 %v310, 0.0
    %v412 = vmax.f32 %v314, 0.0
    %v413 = vmax.f32 %v316, 0.0
    %v414 = vmax.f32 %v320, 0.0
    %v415 = vmax.f32 %v322, 0.0
    %v416 = vmax.f32 %v326, 0.0
    %v417 = vmax.f32 %v328, 0.0
    %v418 = vmax.f32 %v332, 0.0
    %v419 = vmax.f32 %v334, 0.0
    %v420 = vmax.f32 %v338, 0.0
    %v421 = vmax.f32 %v340, 0.0
    %v422 = vmax.f32 %v344, 0.0
    %v423 = vmax.f32 %v346, 0.0
    %v424 = vmax.f32 %v350, 0.0
    %v425 = vmax.f32 %v352, 0.0
    %v426 = vmax.f32 %v356, 0.0
    %v427 = vmax.f32 %v358, 0.0
    %v428 = vmax.f32 %v362, 0.0
    %v429 = vmax.f32 %v364, 0.0
    %v430 = vmax.f32 %v368, 0.0
    %v431 = vmax.f32 %v370, 0.0
    %v432 = vmax.f32 %v374, 0.0
    %v433 = vmax.f32 %v376, 0.0
    %v434 = vmax.f32 %v380, 0.0
    %v435 = vmax.f32 %v382, 0.0
    %v436 = vpack.c.bf16 %v386, %v384
    %v437 = vpack.c.bf16 %v387, %v385
    %v438 = vpack.c.bf16 %v390, %v388
    %v439 = vpack.c.bf16 %v391, %v389
    %v440 = vpack.c.bf16 %v394, %v392
    %v441 = vpack.c.bf16 %v395, %v393
    %v442 = vpack.c.bf16 %v398, %v396
    %v443 = vpack.c.bf16 %v399, %v397
    %v444 = vpack.c.bf16 %v402, %v400
    %v445 = vpack.c.bf16 %v403, %v401
    %v446 = vpack.c.bf16 %v406, %v404
    %v447 = vpack.c.bf16 %v407, %v405
    %v448 = vpack.c.bf16 %v410, %v408
    %v449 = vpack.c.bf16 %v411, %v409
    %v450 = vpack.c.bf16 %v414, %v412
    %v451 = vpack.c.bf16 %v415, %v413
    %v452 = vpack.c.bf16 %v418, %v416
    %v453 = vpack.c.bf16 %v419, %v417
    %v454 = vpack.c.bf16 %v422, %v420
    %v455 = vpack.c.bf16 %v423, %v421
    %v456 = vpack.c.bf16 %v426, %v424
    %v457 = vpack.c.bf16 %v427, %v425
    %v458 = vpack.c.bf16 %v430, %v428
    %v459 = vpack.c.bf16 %v431, %v429
    %v460 = vpack.c.bf16 %v434, %v432
    %v461 = vpack.c.bf16 %v435, %v433
    %v462 = vld [vmem:[#allocation3] sm:$0xff]
    %v463 = vld [vmem:[#allocation3 + $0x8] sm:$0xff]
    %v464 = vld [vmem:[#allocation3 + $0x10] sm:$0xff]
    %v465 = vld [vmem:[#allocation3 + $0x18] sm:$0xff]
    %v466 = vld [vmem:[#allocation3 + $0x20] sm:$0xff]
    %v467 = vld [vmem:[#allocation3 + $0x28] sm:$0xff]
    %v468 = vld [vmem:[#allocation3 + $0x30] sm:$0xff]
    %v469 = vld [vmem:[#allocation3 + $0x38] sm:$0xff]
    %v470 = vld [vmem:[#allocation3 + $0x40] sm:$0xff]
    %v471 = vld [vmem:[#allocation3 + $0x48] sm:$0xff]
    %v472 = vld [vmem:[#allocation3 + $0x50] sm:$0xff]
    %v473 = vld [vmem:[#allocation3 + $0x58] sm:$0xff]
    %v474 = vld [vmem:[#allocation3 + $0x60] sm:$0xff]
    %v475 = vld [vmem:[#allocation3 + $0x68] sm:$0xff]
    %v476 = vld [vmem:[#allocation3 + $0x70] sm:$0xff]
    %v477 = vld [vmem:[#allocation3 + $0x78] sm:$0xff]
    %v478 = vld [vmem:[#allocation3 + $0x80] sm:$0xff]
    %v479 = vld [vmem:[#allocation3 + $0x88] sm:$0xff]
    %v480 = vld [vmem:[#allocation3 + $0x90] sm:$0xff]
    %v481 = vld [vmem:[#allocation3 + $0x98] sm:$0xff]
    %v482 = vld [vmem:[#allocation3 + $0xa0] sm:$0xff]
    %v483 = vld [vmem:[#allocation3 + $0xa8] sm:$0xff]
    %v484 = vld [vmem:[#allocation3 + $0xb0] sm:$0xff]
    %v485 = vld [vmem:[#allocation3 + $0xb8] sm:$0xff]
    %v486 = vld [vmem:[#allocation3 + $0xc0] sm:$0xff]
    %v487 = vld [vmem:[#allocation3 + $0xc8] sm:$0xff]
    %v488 = vld [vmem:[#allocation3 + $0xd0] sm:$0xff]
    %v489 = vld [vmem:[#allocation3 + $0xd8] sm:$0xff]
    %v490 = vld [vmem:[#allocation3 + $0xe0] sm:$0xff]
    %v491 = vld [vmem:[#allocation3 + $0xe8] sm:$0xff]
    %v492 = vld [vmem:[#allocation3 + $0xf0] sm:$0xff]
    %v493 = vld [vmem:[#allocation3 + $0xf8] sm:$0xff]
    %v494 = vld [vmem:[%s4] sm:$0x3]
    %v496 = vlaneseq
    %v497 = vshrl.u32 %v496, 7
    %v498 = vsub.s32 0, %v497
    %v499 = vrot.slane %v494, %v498
    %v500 = vlaneseq
    %v501 = vshrl.u32 %v500, 7
    %v502 = vsub.s32 1, %v501
    %v503 = vrot.slane %v494, %v502
    %v538 = vunpack.c.l.b16 %v462
    %v539 = vunpack.c.h.b16 %v462
    %v540 = vunpack.c.l.b16 %v463
    %v541 = vunpack.c.h.b16 %v463
    %v542 = vunpack.c.l.b16 %v464
    %v543 = vunpack.c.h.b16 %v464
    %v544 = vunpack.c.l.b16 %v465
    %v545 = vunpack.c.h.b16 %v465
    %v546 = vunpack.c.l.b16 %v466
    %v547 = vunpack.c.h.b16 %v466
    %v548 = vunpack.c.l.b16 %v467
    %v549 = vunpack.c.h.b16 %v467
    %v550 = vunpack.c.l.b16 %v468
    %v551 = vunpack.c.h.b16 %v468
    %v552 = vunpack.c.l.b16 %v469
    %v553 = vunpack.c.h.b16 %v469
    %v554 = vunpack.c.l.b16 %v470
    %v555 = vunpack.c.h.b16 %v470
    %v556 = vunpack.c.l.b16 %v471
    %v557 = vunpack.c.h.b16 %v471
    %v558 = vunpack.c.l.b16 %v472
    %v559 = vunpack.c.h.b16 %v472
    %v560 = vunpack.c.l.b16 %v473
    %v561 = vunpack.c.h.b16 %v473
    %v562 = vunpack.c.l.b16 %v474
    %v563 = vunpack.c.h.b16 %v474
    %v564 = vunpack.c.l.b16 %v475
    %v565 = vunpack.c.h.b16 %v475
    %v566 = vunpack.c.l.b16 %v476
    %v567 = vunpack.c.h.b16 %v476
    %v568 = vunpack.c.l.b16 %v477
    %v569 = vunpack.c.h.b16 %v477
    %v570 = vunpack.c.l.b16 %v478
    %v571 = vunpack.c.h.b16 %v478
    %v572 = vunpack.c.l.b16 %v479
    %v573 = vunpack.c.h.b16 %v479
    %v574 = vunpack.c.l.b16 %v480
    %v575 = vunpack.c.h.b16 %v480
    %v576 = vunpack.c.l.b16 %v481
    %v577 = vunpack.c.h.b16 %v481
    %v578 = vunpack.c.l.b16 %v482
    %v579 = vunpack.c.h.b16 %v482
    %v580 = vunpack.c.l.b16 %v483
    %v581 = vunpack.c.h.b16 %v483
    %v582 = vunpack.c.l.b16 %v484
    %v583 = vunpack.c.h.b16 %v484
    %v584 = vunpack.c.l.b16 %v485
    %v585 = vunpack.c.h.b16 %v485
    %v586 = vunpack.c.l.b16 %v486
    %v587 = vunpack.c.h.b16 %v486
    %v588 = vunpack.c.l.b16 %v487
    %v589 = vunpack.c.h.b16 %v487
    %v590 = vunpack.c.l.b16 %v488
    %v591 = vunpack.c.h.b16 %v488
    %v592 = vunpack.c.l.b16 %v489
    %v593 = vunpack.c.h.b16 %v489
    %v594 = vunpack.c.l.b16 %v490
    %v595 = vunpack.c.h.b16 %v490
    %v596 = vunpack.c.l.b16 %v491
    %v597 = vunpack.c.h.b16 %v491
    %v598 = vunpack.c.l.b16 %v492
    %v599 = vunpack.c.h.b16 %v492
    %v600 = vunpack.c.l.b16 %v493
    %v601 = vunpack.c.h.b16 %v493
    %v602 = vpack.c.b16 %v540, %v538
    %v603 = vpack.c.b16 %v541, %v539
    %v604 = vpack.c.b16 %v544, %v542
    %v605 = vpack.c.b16 %v545, %v543
    %v606 = vpack.c.b16 %v548, %v546
    %v607 = vpack.c.b16 %v549, %v547
    %v608 = vpack.c.b16 %v552, %v550
    %v609 = vpack.c.b16 %v553, %v551
    %v610 = vpack.c.b16 %v556, %v554
    %v611 = vpack.c.b16 %v557, %v555
    %v612 = vpack.c.b16 %v560, %v558
    %v613 = vpack.c.b16 %v561, %v559
    %v614 = vpack.c.b16 %v564, %v562
    %v615 = vpack.c.b16 %v565, %v563
    %v616 = vpack.c.b16 %v568, %v566
    %v617 = vpack.c.b16 %v569, %v567
    %v618 = vpack.c.b16 %v572, %v570
    %v619 = vpack.c.b16 %v573, %v571
    %v620 = vpack.c.b16 %v576, %v574
    %v621 = vpack.c.b16 %v577, %v575
    %v622 = vpack.c.b16 %v580, %v578
    %v623 = vpack.c.b16 %v581, %v579
    %v624 = vpack.c.b16 %v584, %v582
    %v625 = vpack.c.b16 %v585, %v583
    %v626 = vpack.c.b16 %v588, %v586
    %v627 = vpack.c.b16 %v589, %v587
    %v628 = vpack.c.b16 %v592, %v590
    %v629 = vpack.c.b16 %v593, %v591
    %v630 = vpack.c.b16 %v596, %v594
    %v631 = vpack.c.b16 %v597, %v595
    %v632 = vpack.c.b16 %v600, %v598
    %v633 = vpack.c.b16 %v601, %v599
    %666 = vmatprep.subr.bf16.mxu0 %v617
    %667 = vmatpush1.bf16.msra.mxu0 %v616
    %668 = vmatprep.subr.bf16.mxu0 %v615
    %669 = vmatpush1.bf16.msra.mxu0 %v614
    %670 = vmatprep.subr.bf16.mxu0 %v613
    %671 = vmatpush1.bf16.msra.mxu0 %v612
    %672 = vmatprep.subr.bf16.mxu0 %v611
    %673 = vmatpush1.bf16.msra.mxu0 %v610
    %674 = vmatprep.subr.bf16.mxu0 %v609
    %675 = vmatpush1.bf16.msra.mxu0 %v608
    %676 = vmatprep.subr.bf16.mxu0 %v607
    %677 = vmatpush1.bf16.msra.mxu0 %v606
    %678 = vmatprep.subr.bf16.mxu0 %v605
    %679 = vmatpush1.bf16.msra.mxu0 %v604
    %680 = vmatprep.subr.bf16.mxu0 %v603
    %681 = vmatpush1.bf16.msra.mxu0 %v602
    %682 = vmatprep.subr.bf16.mxu0 %v633
    %683 = vmatpush2.bf16.msra.mxu0 %v632
    %684 = vmatprep.subr.bf16.mxu0 %v631
    %685 = vmatpush2.bf16.msra.mxu0 %v630
    %686 = vmatprep.subr.bf16.mxu0 %v629
    %687 = vmatpush2.bf16.msra.mxu0 %v628
    %688 = vmatprep.subr.bf16.mxu0 %v627
    %689 = vmatpush2.bf16.msra.mxu0 %v626
    %690 = vmatprep.subr.bf16.mxu0 %v625
    %691 = vmatpush2.bf16.msra.mxu0 %v624
    %692 = vmatprep.subr.bf16.mxu0 %v623
    %693 = vmatpush2.bf16.msra.mxu0 %v622
    %694 = vmatprep.subr.bf16.mxu0 %v621
    %695 = vmatpush2.bf16.msra.mxu0 %v620
    %696 = vmatprep.subr.bf16.mxu0 %v619
    %697 = vmatpush2.bf16.msra.mxu0 %v618
    %698 = vmatprep.mubr.bf16.mxu0 %v437
    %699 = vmatmul.mubr.bf16.gmra.mxu0 %v436
    %v700 = vpop.f32.mrf.mxu0
    %v701 = vadd.f32 %v499, %v700
    %v702 = vpop.f32.mrf.mxu0
    %v703 = vadd.f32 %v503, %v702
    %v704 = vpop.f32.mrf.mxu0
    %v705 = vadd.f32 %v499, %v704
    %v706 = vpop.f32.mrf.mxu0
    %v707 = vadd.f32 %v503, %v706
    %708 = vmatprep.mubr.bf16.mxu0 %v439
    %709 = vmatmul.mubr.bf16.gmra.mxu0 %v438
    %v710 = vpop.f32.mrf.mxu0
    %v711 = vadd.f32 %v499, %v710
    %v712 = vpop.f32.mrf.mxu0
    %v713 = vadd.f32 %v503, %v712
    %v714 = vpop.f32.mrf.mxu0
    %v715 = vadd.f32 %v499, %v714
    %v716 = vpop.f32.mrf.mxu0
    %v717 = vadd.f32 %v503, %v716
    %718 = vmatprep.mubr.bf16.mxu0 %v441
    %719 = vmatmul.mubr.bf16.gmra.mxu0 %v440
    %v720 = vpop.f32.mrf.mxu0
    %v721 = vadd.f32 %v499, %v720
    %v722 = vpop.f32.mrf.mxu0
    %v723 = vadd.f32 %v503, %v722
    %v724 = vpop.f32.mrf.mxu0
    %v725 = vadd.f32 %v499, %v724
    %v726 = vpop.f32.mrf.mxu0
    %v727 = vadd.f32 %v503, %v726
    %728 = vmatprep.mubr.bf16.mxu0 %v443
    %729 = vmatmul.mubr.bf16.gmra.mxu0 %v442
    %v730 = vpop.f32.mrf.mxu0
    %v731 = vadd.f32 %v499, %v730
    %v732 = vpop.f32.mrf.mxu0
    %v733 = vadd.f32 %v503, %v732
    %v734 = vpop.f32.mrf.mxu0
    %v735 = vadd.f32 %v499, %v734
    %v736 = vpop.f32.mrf.mxu0
    %v737 = vadd.f32 %v503, %v736
    %738 = vmatprep.mubr.bf16.mxu0 %v445
    %739 = vmatmul.mubr.bf16.gmra.mxu0 %v444
    %v740 = vpop.f32.mrf.mxu0
    %v741 = vadd.f32 %v499, %v740
    %v742 = vpop.f32.mrf.mxu0
    %v743 = vadd.f32 %v503, %v742
    %v744 = vpop.f32.mrf.mxu0
    %v745 = vadd.f32 %v499, %v744
    %v746 = vpop.f32.mrf.mxu0
    %v747 = vadd.f32 %v503, %v746
    %748 = vmatprep.mubr.bf16.mxu0 %v447
    %749 = vmatmul.mubr.bf16.gmra.mxu0 %v446
    %v750 = vpop.f32.mrf.mxu0
    %v751 = vadd.f32 %v499, %v750
    %v752 = vpop.f32.mrf.mxu0
    %v753 = vadd.f32 %v503, %v752
    %v754 = vpop.f32.mrf.mxu0
    %v755 = vadd.f32 %v499, %v754
    %v756 = vpop.f32.mrf.mxu0
    %v757 = vadd.f32 %v503, %v756
    %758 = vmatprep.mubr.bf16.mxu0 %v449
    %759 = vmatmul.mubr.bf16.gmra.mxu0 %v448
    %v760 = vpop.f32.mrf.mxu0
    %v761 = vadd.f32 %v499, %v760
    %v762 = vpop.f32.mrf.mxu0
    %v763 = vadd.f32 %v503, %v762
    %v764 = vpop.f32.mrf.mxu0
    %v765 = vadd.f32 %v499, %v764
    %v766 = vpop.f32.mrf.mxu0
    %v767 = vadd.f32 %v503, %v766
    %768 = vmatprep.mubr.bf16.mxu0 %v451
    %769 = vmatmul.mubr.bf16.gmra.mxu0 %v450
    %v770 = vpop.f32.mrf.mxu0
    %v771 = vadd.f32 %v499, %v770
    %v772 = vpop.f32.mrf.mxu0
    %v773 = vadd.f32 %v503, %v772
    %v774 = vpop.f32.mrf.mxu0
    %v775 = vadd.f32 %v499, %v774
    %v776 = vpop.f32.mrf.mxu0
    %v777 = vadd.f32 %v503, %v776
    %778 = vmatprep.mubr.bf16.mxu0 %v453
    %779 = vmatmul.mubr.bf16.gmra.mxu0 %v452
    %v780 = vpop.f32.mrf.mxu0
    %v781 = vadd.f32 %v499, %v780
    %v782 = vpop.f32.mrf.mxu0
    %v783 = vadd.f32 %v503, %v782
    %v784 = vpop.f32.mrf.mxu0
    %v785 = vadd.f32 %v499, %v784
    %v786 = vpop.f32.mrf.mxu0
    %v787 = vadd.f32 %v503, %v786
    %788 = vmatprep.mubr.bf16.mxu0 %v455
    %789 = vmatmul.mubr.bf16.gmra.mxu0 %v454
    %v790 = vpop.f32.mrf.mxu0
    %v791 = vadd.f32 %v499, %v790
    %v792 = vpop.f32.mrf.mxu0
    %v793 = vadd.f32 %v503, %v792
    %v794 = vpop.f32.mrf.mxu0
    %v795 = vadd.f32 %v499, %v794
    %v796 = vpop.f32.mrf.mxu0
    %v797 = vadd.f32 %v503, %v796
    %798 = vmatprep.mubr.bf16.mxu0 %v457
    %799 = vmatmul.mubr.bf16.gmra.mxu0 %v456
    %v800 = vpop.f32.mrf.mxu0
    %v801 = vadd.f32 %v499, %v800
    %v802 = vpop.f32.mrf.mxu0
    %v803 = vadd.f32 %v503, %v802
    %v804 = vpop.f32.mrf.mxu0
    %v805 = vadd.f32 %v499, %v804
    %v806 = vpop.f32.mrf.mxu0
    %v807 = vadd.f32 %v503, %v806
    %808 = vmatprep.mubr.bf16.mxu0 %v459
    %809 = vmatmul.mubr.bf16.gmra.mxu0 %v458
    %v810 = vpop.f32.mrf.mxu0
    %v811 = vadd.f32 %v499, %v810
    %v812 = vpop.f32.mrf.mxu0
    %v813 = vadd.f32 %v503, %v812
    %v814 = vpop.f32.mrf.mxu0
    %v815 = vadd.f32 %v499, %v814
    %v816 = vpop.f32.mrf.mxu0
    %v817 = vadd.f32 %v503, %v816
    %818 = vmatprep.mubr.bf16.mxu0 %v461
    %819 = vmatmul.mubr.bf16.gmra.mxu0 %v460
    %v820 = vpop.f32.mrf.mxu0
    %v821 = vadd.f32 %v499, %v820
    %v822 = vpop.f32.mrf.mxu0
    %v823 = vadd.f32 %v503, %v822
    %v824 = vpop.f32.mrf.mxu0
    %v825 = vadd.f32 %v499, %v824
    %v826 = vpop.f32.mrf.mxu0
    %v827 = vadd.f32 %v503, %v826
    %828 = vdwg.mxu0
    %v829 = vmax.f32 %v701, 0.0
    %v830 = vmax.f32 %v703, 0.0
    %v831 = vmax.f32 %v705, 0.0
    %v832 = vmax.f32 %v707, 0.0
    %v833 = vmax.f32 %v711, 0.0
    %v834 = vmax.f32 %v713, 0.0
    %v835 = vmax.f32 %v715, 0.0
    %v836 = vmax.f32 %v717, 0.0
    %v837 = vmax.f32 %v721, 0.0
    %v838 = vmax.f32 %v723, 0.0
    %v839 = vmax.f32 %v725, 0.0
    %v840 = vmax.f32 %v727, 0.0
    %v841 = vmax.f32 %v731, 0.0
    %v842 = vmax.f32 %v733, 0.0
    %v843 = vmax.f32 %v735, 0.0
    %v844 = vmax.f32 %v737, 0.0
    %v845 = vmax.f32 %v741, 0.0
    %v846 = vmax.f32 %v743, 0.0
    %v847 = vmax.f32 %v745, 0.0
    %v848 = vmax.f32 %v747, 0.0
    %v849 = vmax.f32 %v751, 0.0
    %v850 = vmax.f32 %v753, 0.0
    %v851 = vmax.f32 %v755, 0.0
    %v852 = vmax.f32 %v757, 0.0
    %v853 = vmax.f32 %v761, 0.0
    %v854 = vmax.f32 %v763, 0.0
    %v855 = vmax.f32 %v765, 0.0
    %v856 = vmax.f32 %v767, 0.0
    %v857 = vmax.f32 %v771, 0.0
    %v858 = vmax.f32 %v773, 0.0
    %v859 = vmax.f32 %v775, 0.0
    %v860 = vmax.f32 %v777, 0.0
    %v861 = vmax.f32 %v781, 0.0
    %v862 = vmax.f32 %v783, 0.0
    %v863 = vmax.f32 %v785, 0.0
    %v864 = vmax.f32 %v787, 0.0
    %v865 = vmax.f32 %v791, 0.0
    %v866 = vmax.f32 %v793, 0.0
    %v867 = vmax.f32 %v795, 0.0
    %v868 = vmax.f32 %v797, 0.0
    %v869 = vmax.f32 %v801, 0.0
    %v870 = vmax.f32 %v803, 0.0
    %v871 = vmax.f32 %v805, 0.0
    %v872 = vmax.f32 %v807, 0.0
    %v873 = vmax.f32 %v811, 0.0
    %v874 = vmax.f32 %v813, 0.0
    %v875 = vmax.f32 %v815, 0.0
    %v876 = vmax.f32 %v817, 0.0
    %v877 = vmax.f32 %v821, 0.0
    %v878 = vmax.f32 %v823, 0.0
    %v879 = vmax.f32 %v825, 0.0
    %v880 = vmax.f32 %v827, 0.0
    %v881 = vld [vmem:[%s5] sm:$0x3]
    %v882 = vpack.c.bf16 %v831, %v829
    %v883 = vpack.c.bf16 %v832, %v830
    %v884 = vpack.c.bf16 %v835, %v833
    %v885 = vpack.c.bf16 %v836, %v834
    %v886 = vpack.c.bf16 %v839, %v837
    %v887 = vpack.c.bf16 %v840, %v838
    %v888 = vpack.c.bf16 %v843, %v841
    %v889 = vpack.c.bf16 %v844, %v842
    %v890 = vpack.c.bf16 %v847, %v845
    %v891 = vpack.c.bf16 %v848, %v846
    %v892 = vpack.c.bf16 %v851, %v849
    %v893 = vpack.c.bf16 %v852, %v850
    %v894 = vpack.c.bf16 %v855, %v853
    %v895 = vpack.c.bf16 %v856, %v854
    %v896 = vpack.c.bf16 %v859, %v857
    %v897 = vpack.c.bf16 %v860, %v858
    %v898 = vpack.c.bf16 %v863, %v861
    %v899 = vpack.c.bf16 %v864, %v862
    %v900 = vpack.c.bf16 %v867, %v865
    %v901 = vpack.c.bf16 %v868, %v866
    %v902 = vpack.c.bf16 %v871, %v869
    %v903 = vpack.c.bf16 %v872, %v870
    %v904 = vpack.c.bf16 %v875, %v873
    %v905 = vpack.c.bf16 %v876, %v874
    %v906 = vpack.c.bf16 %v879, %v877
    %v907 = vpack.c.bf16 %v880, %v878
    %v908 = vld [vmem:[#allocation2] sm:$0x1]
    %910 = vset.pattern.permute.xlu0 0
    %911 = vperm.xlu0 %910, %v908
    %v912 = vpop.permute.xlu0 %911
    %v914 = vlaneseq
    %v915 = vshrl.u32 %v914, 7
    %v916 = vsub.s32 0, %v915
    %v917 = vrot.slane %v912, %v916
    %v920 = vunpack.c.l.s4 1966171168
    %v921 = vunpack.c.0.s8 %v920
    %v922 = vlaneseq
    %v923 = vshrl.u32 %v922, 7
    %v924 = vsub.s32 %v921, %v923
    %v925 = vrot.slane %v881, %v924
    %v926 = vcombine.high %v925, %v925
    %v928 = vunpack.c.l.s4 1966171168
    %v929 = vunpack.c.0.s8 %v928
    %v930 = vlaneseq
    %v931 = vshrl.u32 %v930, 7
    %v932 = vsub.s32 %v929, %v931
    %v933 = vrot.slane %v925, %v932
    %v935 = vunpack.c.l.s4 1966171168
    %v936 = vunpack.c.0.s8 %v935
    %v937 = vlaneseq
    %v938 = vshrl.u32 %v937, 7
    %v939 = vsub.s32 %v936, %v938
    %v940 = vrot.slane %v926, %v939
    %943 = vmatprep.subr.bf16.mxu0 %v897
    %944 = vmatpush1.bf16.xpose.msra.mxu0 %v896
    %945 = vmatprep.subr.bf16.mxu0 %v895
    %946 = vmatpush1.bf16.xpose.msra.mxu0 %v894
    %947 = vmatprep.subr.bf16.mxu0 %v893
    %948 = vmatpush1.bf16.xpose.msra.mxu0 %v892
    %949 = vmatprep.subr.bf16.mxu0 %v891
    %950 = vmatpush1.bf16.xpose.msra.mxu0 %v890
    %951 = vmatprep.subr.bf16.mxu0 %v889
    %952 = vmatpush1.bf16.xpose.msra.mxu0 %v888
    %953 = vmatprep.subr.bf16.mxu0 %v887
    %954 = vmatpush1.bf16.xpose.msra.mxu0 %v886
    %955 = vmatprep.subr.bf16.mxu0 %v885
    %956 = vmatpush1.bf16.xpose.msra.mxu0 %v884
    %957 = vmatprep.subr.bf16.mxu0 %v883
    %958 = vmatpush1.bf16.xpose.msra.mxu0 %v882
    %959 = vmatprep.subr.bf16.mxu0 0
    %960 = vmatpush2.bf16.xpose.msra.mxu0 0
    %961 = vmatprep.subr.bf16.mxu0 0
    %962 = vmatpush2.bf16.xpose.msra.mxu0 0
    %963 = vmatprep.subr.bf16.mxu0 0
    %964 = vmatpush2.bf16.xpose.msra.mxu0 0
    %965 = vmatprep.subr.bf16.mxu0 %v907
    %966 = vmatpush2.bf16.xpose.msra.mxu0 %v906
    %967 = vmatprep.subr.bf16.mxu0 %v905
    %968 = vmatpush2.bf16.xpose.msra.mxu0 %v904
    %969 = vmatprep.subr.bf16.mxu0 %v903
    %970 = vmatpush2.bf16.xpose.msra.mxu0 %v902
    %971 = vmatprep.subr.bf16.mxu0 %v901
    %972 = vmatpush2.bf16.xpose.msra.mxu0 %v900
    %973 = vmatprep.subr.bf16.mxu0 %v899
    %974 = vmatpush2.bf16.xpose.msra.mxu0 %v898
    %975 = vmatprep.mubr.bf16.mxu0 %v940
    %976 = vmatmul.mubr.bf16.gmra.mxu0 %v933
    %v977 = vpop.f32.mrf.mxu0
    %v978 = vadd.f32 %v917, %v977
    %v979 = vpop.f32.mrf.mxu0
    %v980 = vadd.f32 %v917, %v979
    %v981 = vpop.f32.mrf.mxu0
    %v982 = vpop.f32.mrf.mxu0
    %983 = vdwg.mxu0
    %v986 = vcombine.low %v978, %v980
    %v988 = vunpack.c.l.s4 1966171168
    %v989 = vunpack.c.0.s8 %v988
    %v990 = vlaneseq
    %v991 = vshrl.u32 %v990, 7
    %v992 = vsub.s32 %v989, %v991
    %v993 = vrot.slane %v986, %v992
    %v995 = vunpack.c.l.s4 1966171168
    %v996 = vunpack.c.0.s8 %v995
    %v997 = vlaneseq
    %v998 = vshrl.u32 %v997, 7
    %v999 = vsub.s32 %v996, %v998
    %v1000 = vrot.slane %v993, %v999
    %v1002 = vlaneseq
    %vm1003 = vcmp.ge.s32.totalorder %v1002, 0
    %vm1004 = vcmp.lt.s32.totalorder %v1002, 208
    %vm1005 = vmand %vm1003, %vm1004
    %1006 = vst.msk [vmem:[#allocation6] sm:$0x3] %vm1005, %v1000
    // Predicated region
    $region34: #{tpu_custom_call.1} parent=1 // pred_check
      _
    $region35: #{tpu_custom_call.1} parent=1 // pred_check_branch
      %1008 = sbr.rel (0) target = $region37
    $region36: #{tpu_custom_call.1} parent=1 // pred_region
      %s1010 = ssub.s32 32, 32
      %1011 = vsyncadd [#allocation5], %s1010
      %s1013 = sshll.u32 [#allocation6], 4
      %s1014 = int_to_ptr.vmem [resolvable:$true] %s1013
      %1016 = dma.vmem_to_hbm [thread:$0]  %s1014, 32, %s7, [#allocation5]
    $region37: #{tpu_custom_call.1} parent=1 // pred_fallthru
      _
    // Predicated region
    $region38: #{tpu_custom_call.1} parent=1 // pred_check
      _
    $region39: #{tpu_custom_call.1} parent=1 // pred_check_branch
      %1018 = sbr.rel (0) target = $region41
    $region40: #{tpu_custom_call.1} parent=1 // pred_region
      %1019 = dma.done [#allocation5], 32
    $region41: #{tpu_custom_call.1} parent=1 // pred_fallthru
      _
    %1020 = vsyncpa [#allocation4], 1
    %1021 = vsyncpa [#allocation5], 1

</llo_original>
